<compile_context>
chip_gen: v7x
topology: tpu7x:2x2x1
jax: 0.10.0
libtpu: 0.0.40
codegen_flags: <defaults>
</compile_context>

<pallas_src>
import jax
import jax.numpy as jnp
from jax.experimental import pallas as pl
from jax.experimental.pallas import tpu as pltpu

_MiB = 1024 * 1024


def _modulate_proj_kernel(x_ref, w_ref, b_ref, o_ref):
    # SiLU in f32 (v5e has no bf16 VPU/EUP datapath; the sigmoid rides the
    # otherwise-idle EUP slot and is fully hidden under the weight DMA, so the
    # per-tile recompute is free for this mem-bound kernel).
    x = x_ref[...].astype(jnp.float32)
    act = x * jax.nn.sigmoid(x)
    # Feed the MXU at the stored weight dtype (bf16 weight -> native bf16xbf16
    # MXU path) with f32 accumulation.
    acc = jnp.dot(act.astype(w_ref.dtype), w_ref[...],
                  preferred_element_type=jnp.float32)
    o_ref[...] = (acc + b_ref[...].astype(jnp.float32)).astype(o_ref.dtype)


def _vmem_budgets():
    """Per-chip (weight-buffer budget, scoped-VMEM limit) derived from the real
    VMEM capacity so one wrapper works on v5e/v6e (128 MiB) and v7x (64 MiB/TC)
    without retuning."""
    try:
        vmem = pltpu.get_tpu_info().vmem_capacity_bytes
    except Exception:
        vmem = 64 * _MiB  # conservative (v7x per-TC) fallback
    # ~20% of VMEM per weight pipeline buffer (double-buffered by Pallas),
    # capped at 16 MiB; a generous scoped limit well under physical VMEM.
    weight_buf = max(4 * _MiB, min(16 * _MiB, vmem // 5))
    vmem_limit = min(64 * _MiB, (vmem * 3) // 4)
    return weight_buf, vmem_limit


def _pick_tile_n(N, H, w_itemsize, max_bytes):
    """Largest multiple of 128 dividing N (N already 128-aligned) whose
    (H, tile_n) weight chunk fits in max_bytes, capped at N/2 when possible so
    grid_n >= 2 (both v7x TensorCores share the weight stream; harmless on
    single-core v5e/v6e)."""
    assert N % 128 == 0
    upper = N if N <= 128 else N // 2
    t = upper - (upper % 128)
    while t >= 128:
        if N % t == 0 and H * t * w_itemsize <= max_bytes:
            return t
        t -= 128
    return 128  # smallest lane-aligned tile (only hit for very large H)


def modulate_projection(x, weight, bias, *, tile_n=None,
                        max_weight_bytes_per_buffer=None,
                        vmem_limit_bytes=None):
    """ModulateProjection forward: y = silu(x) @ weight + bias.

    x: [M, H], weight: [H, H*factor], bias: [H*factor] -> [M, H*factor].
    """
    M, H = x.shape
    Hw, N = weight.shape
    assert Hw == H and bias.shape == (N,)

    budget_buf, budget_limit = _vmem_budgets()
    if max_weight_bytes_per_buffer is None:
        max_weight_bytes_per_buffer = budget_buf
    if vmem_limit_bytes is None:
        vmem_limit_bytes = budget_limit

    # Pad N to a multiple of 128: lane-dense (unmasked) output stores and a
    # properly tiled weight stream even for irregular N.
    N_pad = ((N + 127) // 128) * 128
    if N_pad != N:
        weight = jnp.pad(weight, ((0, 0), (0, N_pad - N)))
        bias = jnp.pad(bias, ((0, N_pad - N),))

    if tile_n is None:
        tile_n = _pick_tile_n(N_pad, H, weight.dtype.itemsize,
                              max_weight_bytes_per_buffer)
    assert N_pad % tile_n == 0 and tile_n % 128 == 0
    grid_n = N_pad // tile_n

    bias2d = bias.reshape(1, N_pad)

    # If divisibility forces many small N tiles, slicing (H, tile_n) out of a
    # row-major [H, N] weight gives only tile_n*itemsize contiguous bytes per
    # row.  Re-tile into a contiguous [grid_n, H, tile_n] slab so each weight
    # DMA is one long HBM burst.  (For static module weights this re-tiling can
    # be hoisted to module init and done once.)
    pretile = tile_n <= 256 and grid_n >= 3
    if pretile:
        w_arg = jnp.transpose(weight.reshape(H, grid_n, tile_n), (1, 0, 2))
        w_spec = pl.BlockSpec((None, H, tile_n), lambda j: (j, 0, 0))
    else:
        w_arg = weight
        w_spec = pl.BlockSpec((H, tile_n), lambda j: (0, j))

    cost = pl.CostEstimate(
        flops=2 * M * H * N_pad,
        transcendentals=M * H * grid_n,  # SiLU recomputed per N tile
        bytes_accessed=(H * N_pad * weight.dtype.itemsize   # weight stream (dominant)
                        + M * H * x.dtype.itemsize
                        + M * N_pad * x.dtype.itemsize
                        + N_pad * bias.dtype.itemsize),
    )

    out = pl.pallas_call(
        _modulate_proj_kernel,
        out_shape=jax.ShapeDtypeStruct((M, N_pad), x.dtype),
        grid_spec=pltpu.PrefetchScalarGridSpec(
            num_scalar_prefetch=0,
            grid=(grid_n,),
            in_specs=[
                # x: full resident block, constant index across the N grid
                # (its double-buffer is 2*M*H bytes -- negligible vs the weight).
                pl.BlockSpec((M, H), lambda j: (0, 0)),
                # weight: streamed over N in lane-dense chunks.
                w_spec,
                # bias: matching (1, tile_n) slice.
                pl.BlockSpec((1, tile_n), lambda j: (0, j)),
            ],
            out_specs=pl.BlockSpec((M, tile_n), lambda j: (0, j)),
        ),
        compiler_params=pltpu.CompilerParams(
            # Parallel N axis lets v7x's two TensorCores split the weight
            # stream; harmless on single-core v5e/v6e.
            dimension_semantics=("parallel",),
            vmem_limit_bytes=vmem_limit_bytes,
        ),
        cost_estimate=cost,
    )(x, w_arg, bias2d)

    return out if N_pad == N else out[:, :N]


def modulate_projection_ref(x, weight, bias):
    act = x.astype(jnp.float32) * jax.nn.sigmoid(x.astype(jnp.float32))
    out = act @ weight.astype(jnp.float32) + bias.astype(jnp.float32)
    return out.astype(x.dtype)


if __name__ == "__main__":
    key = jax.random.PRNGKey(0)

    # Case 1: tiny f32 config matching module defaults; N=64 exercises the
    # pad-to-128 path (single tile, output sliced back to 64).
    hidden, factor, batch = 32, 2, 8
    k1, k2, k3, key = jax.random.split(key, 4)
    x = jax.random.normal(k1, (batch, hidden), dtype=jnp.float32)
    w = jax.random.normal(k2, (hidden, hidden * factor), dtype=jnp.float32) * 0.02
    b = jax.random.normal(k3, (hidden * factor,), dtype=jnp.float32) * 0.02
    out = jax.block_until_ready(modulate_projection(x, w, b))
    ref = modulate_projection_ref(x, w, b)
    assert out.shape == (batch, hidden * factor)
    assert jnp.allclose(out, ref, atol=1e-5, rtol=1e-5), "f32 padded-N case mismatch"

    # Case 2: bf16 weights, auto tile picker (N=512 -> tile_n=256, grid_n=2:
    # keeps both v7x TensorCores busy), odd batch size.
    hidden, factor, batch = 128, 4, 6
    k1, k2, k3, key = jax.random.split(key, 4)
    x = jax.random.normal(k1, (batch, hidden), dtype=jnp.float32)
    w = (jax.random.normal(k2, (hidden, hidden * factor), dtype=jnp.float32)
         * 0.02).astype(jnp.bfloat16)
    b = jax.random.normal(k3, (hidden * factor,), dtype=jnp.float32) * 0.02
    out = jax.block_until_ready(modulate_projection(x, w, b))
    ref = modulate_projection_ref(x, w, b)
    assert out.shape == (batch, hidden * factor)
    assert jnp.allclose(out, ref, atol=1e-2, rtol=1e-2), "bf16 case mismatch"

    # Case 3: forced small tile (tile_n=128, N=768 -> grid_n=6) exercises the
    # contiguous pre-tiled [grid_n, H, tile_n] weight path.
    hidden, factor, batch = 128, 6, 4
    k1, k2, k3, key = jax.random.split(key, 4)
    x = jax.random.normal(k1, (batch, hidden), dtype=jnp.float32)
    w = (jax.random.normal(k2, (hidden, hidden * factor), dtype=jnp.float32)
         * 0.02).astype(jnp.bfloat16)
    b = jax.random.normal(k3, (hidden * factor,), dtype=jnp.float32) * 0.02
    out = jax.block_until_ready(modulate_projection(x, w, b, tile_n=128))
    ref = modulate_projection_ref(x, w, b)
    assert out.shape == (batch, hidden * factor)
    assert jnp.allclose(out, ref, atol=1e-2, rtol=1e-2), "pre-tiled case mismatch"

    print("KERNEL_OK")
</pallas_src>

<mosaic_0001>
module attributes {stable_mosaic.version = 11 : i64} {
  func.func @_modulate_proj_kernel(%arg0: i32, %arg1: memref<8x32xf32, #tpu.memory_space<vmem>>, %arg2: memref<32x128xf32, #tpu.memory_space<vmem>>, %arg3: memref<1x128xf32, #tpu.memory_space<vmem>>, %arg4: memref<8x128xf32, #tpu.memory_space<vmem>>) attributes {dimension_semantics = [#tpu.dimension_semantics<parallel>], iteration_bounds = array<i64: 1>, scalar_prefetch = 0 : i64, scratch_operands = 0 : i64, tpu.core_type = #tpu.core_type<tc>, window_params = [{pipeline_mode = #tpu.pipeline_mode<synchronous>, transform_indices = @transform_0, window_bounds = array<i64: 8, 32>}, {transform_indices = @transform_1, window_bounds = array<i64: 32, 128>}, {transform_indices = @transform_2, window_bounds = array<i64: 1, 128>}, {transform_indices = @transform_3, window_bounds = array<i64: 8, 128>}]} {
    %c0 = arith.constant 0 : index
    %c0_0 = arith.constant 0 : index
    %0 = vector.load %arg1[%c0, %c0_0] : memref<8x32xf32, #tpu.memory_space<vmem>>, vector<8x32xf32>
    %1 = arith.negf %0 : vector<8x32xf32>
    %2 = math.exp %1 : vector<8x32xf32>
    %cst = arith.constant 1.000000e+00 : f32
    %3 = vector.broadcast %cst : f32 to vector<8x32xf32>
    %4 = arith.addf %3, %2 : vector<8x32xf32>
    %5 = arith.divf %3, %4 : vector<8x32xf32>
    %6 = arith.mulf %0, %5 : vector<8x32xf32>
    %c0_1 = arith.constant 0 : index
    %c0_2 = arith.constant 0 : index
    %7 = vector.load %arg2[%c0_1, %c0_2] : memref<32x128xf32, #tpu.memory_space<vmem>>, vector<32x128xf32>
    %cst_3 = arith.constant dense<0.000000e+00> : vector<8x128xf32>
    %8 = tpu.matmul %6, %7, %cst_3 {dimension_numbers = #tpu.dot_dimension_numbers<[1], [0], [0], [1], [0, 0, 1, 1], [], []>} : vector<8x32xf32>, vector<32x128xf32>, vector<8x128xf32> -> vector<8x128xf32>
    %c0_4 = arith.constant 0 : index
    %c0_5 = arith.constant 0 : index
    %9 = vector.load %arg3[%c0_4, %c0_5] : memref<1x128xf32, #tpu.memory_space<vmem>>, vector<1x128xf32>
    %10 = vector.broadcast %9 : vector<1x128xf32> to vector<8x128xf32>
    %11 = arith.addf %8, %10 : vector<8x128xf32>
    %c0_6 = arith.constant 0 : index
    %c0_7 = arith.constant 0 : index
    %12 = vector.load %arg4[%c0_6, %c0_7] : memref<8x128xf32, #tpu.memory_space<vmem>>, vector<8x128xf32>
    tpu.vector_store %arg4[%c0_6, %c0_7], %11 {strides = array<i32>} : memref<8x128xf32, #tpu.memory_space<vmem>>, vector<8x128xf32>,
    return
  }
  func.func @transform_0(%arg0: i32) -> (i32, i32) {
    %c0_i32 = arith.constant 0 : i32
    %c0_i32_0 = arith.constant 0 : i32
    %c0_i32_1 = arith.constant 0 : i32
    return %c0_i32, %c0_i32_0 : i32, i32
  }
  func.func @transform_1(%arg0: i32) -> (i32, i32) {
    %c0_i32 = arith.constant 0 : i32
    %c0_i32_0 = arith.constant 0 : i32
    return %c0_i32, %arg0 : i32, i32
  }
  func.func @transform_2(%arg0: i32) -> (i32, i32) {
    %c0_i32 = arith.constant 0 : i32
    %c0_i32_0 = arith.constant 0 : i32
    return %c0_i32, %arg0 : i32, i32
  }
  func.func @transform_3(%arg0: i32) -> (i32, i32) {
    %c0_i32 = arith.constant 0 : i32
    %c0_i32_0 = arith.constant 0 : i32
    return %c0_i32, %arg0 : i32, i32
  }
}

</mosaic_0001>

<llo_original>
// kernel: tpu_custom_call.1
$region0: #{tpu_custom_call.1}
  #allocation0 [shape = 'u32[]', space=smem, size = 0x4, offset = 0x4, fixed_abs, tag = 'smem constant byte address 0x4 - core index']
  #allocation1 [shape = 'u32[144,128]{1,0:T(1,128)}', space=vmem, size = 0x12000, scoped, tag = 'internal scratch']
  %s0 = inlined_call_operand.hbm [shape: f32[8,32], index: 0, kind: input, shape index: {}]
  %s1 = inlined_call_operand.hbm [shape: f32[32,128], index: 1, kind: input, shape index: {}]
  %s2 = inlined_call_operand.vmem [shape: f32[1,128], index: 2, kind: input, shape index: {}]
  %s3 = inlined_call_operand.hbm [shape: f32[8,128], index: 3, kind: output, shape index: {}]
  %s4 = sld [smem:[#allocation0]]
  $region30: #{tpu_custom_call.1} parent=0
    _
  %s6 = ssub.s32 1, %s4
  %s7 = scalar_select 0, %s6, %s4
  $region1: #{tpu_custom_call.1} parent=0
    #allocation2 [shape = 'u8[4096]{0}', space=vmem, size = 0x1000, scoped, tag = 'input window, operand 0, single buffered']
    #allocation3 [shape = 's32[1]{0}', space=sflag, size = 0x4, scoped, tag = 'scoped memory for tpu_custom_call.1']
    #allocation4 [shape = 's32[1]{0}', space=sflag, size = 0x4, scoped, tag = 'scoped memory for tpu_custom_call.1']
    #allocation5 [shape = 'u8[16384]{0}', space=vmem, size = 0x4000, scoped, tag = 'input window, operand 1, single buffered']
    #allocation6 [shape = 's32[1]{0}', space=sflag, size = 0x4, scoped, tag = 'scoped memory for tpu_custom_call.1']
    #allocation7 [shape = 'u8[4096]{0}', space=vmem, size = 0x1000, scoped, tag = 'output window, operand 0, single buffered']
    %8 = vsyncpa [#allocation3], 0
    %9 = vsyncpa [#allocation6], 0
    %10 = vsyncpa [#allocation4], 0
    // Predicated region
    $region2: #{tpu_custom_call.1} parent=1 // pred_check
      _
    $region3: #{tpu_custom_call.1} parent=1 // pred_check_branch
      %12 = sbr.rel (0) target = $region5
    $region4: #{tpu_custom_call.1} parent=1 // pred_region
      %s14 = ssub.s32 128, 128
      %15 = vsyncadd [#allocation3], %s14
      %s17 = sshll.u32 [#allocation2], 4
      %s18 = int_to_ptr.vmem [resolvable:$true] %s17
      %20 = dma.hbm_to_vmem [thread:$0]  %s0, 128, %s18, [#allocation3]
    $region5: #{tpu_custom_call.1} parent=1 // pred_fallthru
      _
    // Predicated region
    $region6: #{tpu_custom_call.1} parent=1 // pred_check
      _
    $region7: #{tpu_custom_call.1} parent=1 // pred_check_branch
      %22 = sbr.rel (0) target = $region9
    $region8: #{tpu_custom_call.1} parent=1 // pred_region
      %s24 = ssub.s32 512, 512
      %25 = vsyncadd [#allocation6], %s24
      %s26 = sshll.u32 [#allocation5], 4
      %s27 = int_to_ptr.vmem [resolvable:$true] %s26
      %32 = dma.hbm_to_vmem [thread:$0]  %s1, 512, %s27, [#allocation6], 128, 128, 8
    $region9: #{tpu_custom_call.1} parent=1 // pred_fallthru
      _
    // Predicated region
    $region10: #{tpu_custom_call.1} parent=1 // pred_check
      _
    $region11: #{tpu_custom_call.1} parent=1 // pred_check_branch
      %34 = sbr.rel (0) target = $region13
    $region12: #{tpu_custom_call.1} parent=1 // pred_region
      _
    $region13: #{tpu_custom_call.1} parent=1 // pred_fallthru
      _
    // Predicated region
    $region14: #{tpu_custom_call.1} parent=1 // pred_check
      _
    $region15: #{tpu_custom_call.1} parent=1 // pred_check_branch
      %36 = sbr.rel (0) target = $region17
    $region16: #{tpu_custom_call.1} parent=1 // pred_region
      %37 = dma.done [#allocation3], 128
    $region17: #{tpu_custom_call.1} parent=1 // pred_fallthru
      _
    // Predicated region
    $region18: #{tpu_custom_call.1} parent=1 // pred_check
      _
    $region19: #{tpu_custom_call.1} parent=1 // pred_check_branch
      %39 = sbr.rel (0) target = $region21
    $region20: #{tpu_custom_call.1} parent=1 // pred_region
      %40 = dma.done [#allocation6], 512
    $region21: #{tpu_custom_call.1} parent=1 // pred_fallthru
      _
    %v41 = vld [vmem:[#allocation2] sm:$0xff]
    %v42 = vxor.u32 %v41, 2147483648
    %v43 = vmul.f32 %v42, 1.442695
    %v44 = vpow.pop %v43
    %v45 = vadd.f32 %v44, 1.0
    %v46 = vrcp.pop %v45
    %v47 = vmul.f32 1.0, %v46
    %v48 = vmul.f32 %v41, %v47
    %v49 = vld [vmem:[#allocation5] sm:$0xff]
    %v50 = vld [vmem:[#allocation5 + $0x8] sm:$0xff]
    %v51 = vld [vmem:[#allocation5 + $0x10] sm:$0xff]
    %v52 = vld [vmem:[#allocation5 + $0x18] sm:$0xff]
    %v53 = vld [vmem:[%s2] sm:$0x1]
    %v55 = vlaneseq
    %v56 = vshrl.u32 %v55, 7
    %v57 = vsub.s32 0, %v56
    %v58 = vrot.slane %v53, %v57
    %vm60 = vcmask 261120
    %v62 = vsel %vm60, %v48, 0
    %64 = vmatprep.subr.mxu0 0.0
    %65 = vmatpush1.msra.mxu0 %v49
    %66 = vmatprep.subr.mxu0 0.0
    %67 = vmatpush1.msra.mxu0 %v50
    %68 = vmatprep.subr.mxu0 0.0
    %69 = vmatpush1.msra.mxu0 %v51
    %70 = vmatprep.subr.mxu0 0.0
    %71 = vmatpush1.msra.mxu0 %v52
    %72 = vmatprep.subr.mxu0 0.0
    %73 = vmatpush1.msra.mxu0 0.0
    %74 = vmatprep.subr.mxu0 0.0
    %75 = vmatpush1.msra.mxu0 0.0
    %76 = vmatprep.subr.mxu0 0.0
    %77 = vmatpush1.msra.mxu0 0.0
    %78 = vmatprep.subr.mxu0 0.0
    %79 = vmatpush1.msra.mxu0 0.0
    %80 = vmatprep.subr.mxu0 0.0
    %81 = vmatpush1.msra.mxu0 0.0
    %82 = vmatprep.subr.mxu0 0.0
    %83 = vmatpush1.msra.mxu0 0.0
    %84 = vmatprep.subr.mxu0 0.0
    %85 = vmatpush1.msra.mxu0 0.0
    %86 = vmatprep.subr.mxu0 0.0
    %87 = vmatpush1.msra.mxu0 0.0
    %88 = vmatprep.subr.mxu0 0.0
    %89 = vmatpush1.msra.mxu0 0.0
    %90 = vmatprep.subr.mxu0 0.0
    %91 = vmatpush1.msra.mxu0 0.0
    %92 = vmatprep.subr.mxu0 0.0
    %93 = vmatpush1.msra.mxu0 0.0
    %94 = vmatprep.subr.mxu0 0.0
    %95 = vmatpush1.msra.mxu0 0.0
    %96 = vmatprep.subr.mxu0 0.0
    %97 = vmatpush1.msra.mxu0 0.0
    %98 = vmatprep.subr.mxu0 0.0
    %99 = vmatpush1.msra.mxu0 0.0
    %100 = vmatprep.subr.mxu0 0.0
    %101 = vmatpush1.msra.mxu0 0.0
    %102 = vmatprep.subr.mxu0 0.0
    %103 = vmatpush1.msra.mxu0 0.0
    %104 = vmatprep.subr.mxu0 0.0
    %105 = vmatpush1.msra.mxu0 0.0
    %106 = vmatprep.subr.mxu0 0.0
    %107 = vmatpush1.msra.mxu0 0.0
    %108 = vmatprep.subr.mxu0 0.0
    %109 = vmatpush1.msra.mxu0 0.0
    %110 = vmatprep.subr.mxu0 0.0
    %111 = vmatpush1.msra.mxu0 0.0
    %112 = vmatprep.subr.mxu0 0.0
    %113 = vmatpush1.msra.mxu0 0.0
    %114 = vmatprep.subr.mxu0 0.0
    %115 = vmatpush1.msra.mxu0 0.0
    %116 = vmatprep.subr.mxu0 0.0
    %117 = vmatpush1.msra.mxu0 0.0
    %118 = vmatprep.subr.mxu0 0.0
    %119 = vmatpush1.msra.mxu0 0.0
    %120 = vmatprep.subr.mxu0 0.0
    %121 = vmatpush1.msra.mxu0 0.0
    %122 = vmatprep.subr.mxu0 0.0
    %123 = vmatpush1.msra.mxu0 0.0
    %124 = vmatprep.subr.mxu0 0.0
    %125 = vmatpush1.msra.mxu0 0.0
    %126 = vmatprep.subr.mxu0 0.0
    %127 = vmatpush1.msra.mxu0 0.0
    %128 = vmatprep.mubr.f32.mxu0 0.0
    %129 = vmatmul.mubr.f32.gmra.mrb[0].mxu0 %v62
    %v130 = vpop.f32.mrb[0].mxu0
    %v131 = vadd.f32 %v58, %v130
    %v132 = vpop.f32.mrb[0].mxu0
    %133 = vdwg.mxu0
    %134 = vst [vmem:[#allocation7] sm:$0xff] %v131
    // Predicated region
    $region22: #{tpu_custom_call.1} parent=1 // pred_check
      _
    $region23: #{tpu_custom_call.1} parent=1 // pred_check_branch
      %136 = sbr.rel (0) target = $region25
    $region24: #{tpu_custom_call.1} parent=1 // pred_region
      %s138 = ssub.s32 128, 128
      %139 = vsyncadd [#allocation4], %s138
      %s141 = sshll.u32 [#allocation7], 4
      %s142 = int_to_ptr.vmem [resolvable:$true] %s141
      %144 = dma.vmem_to_hbm [thread:$0]  %s142, 128, %s3, [#allocation4]
    $region25: #{tpu_custom_call.1} parent=1 // pred_fallthru
      _
    // Predicated region
    $region26: #{tpu_custom_call.1} parent=1 // pred_check
      _
    $region27: #{tpu_custom_call.1} parent=1 // pred_check_branch
      %146 = sbr.rel (0) target = $region29
    $region28: #{tpu_custom_call.1} parent=1 // pred_region
      %147 = dma.done [#allocation4], 128
    $region29: #{tpu_custom_call.1} parent=1 // pred_fallthru
      _
    %148 = vsyncpa [#allocation3], 1
    %149 = vsyncpa [#allocation6], 1
    %150 = vsyncpa [#allocation4], 1

</llo_original>
